<compile_context>
chip_gen: v7x
topology: tpu7x:2x2x1
jax: 0.10.0
libtpu: 0.0.40
codegen_flags: <defaults>
</compile_context>

<pallas_src>
import math

import numpy as np
import jax
import jax.numpy as jnp
from jax.experimental import pallas as pl
from jax.experimental.pallas import tpu as pltpu


# ----------------------------------------------------------------------------
# In-kernel helpers
# ----------------------------------------------------------------------------
def _erf(x):
    # Abramowitz & Stegun 7.1.26, |err| < 1.5e-7 (only exp/div -> safe in Mosaic).
    a1, a2, a3, a4, a5 = 0.254829592, -0.284496736, 1.421413741, -1.453152027, 1.061405429
    p = 0.3275911
    s = jnp.where(x >= 0.0, 1.0, -1.0)
    ax = jnp.abs(x)
    t = 1.0 / (1.0 + p * ax)
    poly = ((((a5 * t + a4) * t + a3) * t + a2) * t + a1) * t
    return s * (1.0 - poly * jnp.exp(-ax * ax))


def _gelu(x):
    # exact (erf-based) GELU, matching torch.nn.GELU() default
    return 0.5 * x * (1.0 + _erf(x * 0.7071067811865476))


# ----------------------------------------------------------------------------
# Fused forward kernel: one grid step = KB batch elements.
#   x_ref  : (KB, C, HW)  activations (C on sublanes, HW on lanes)
#   w3_ref : (2C, C)      stacked conv3 weight: rows [0:C]=W3a (on x),
#                         rows [C:2C]=W3b (on x1 = s*x)
#   gp_ref : (C+2, C4+1)  packed small params:
#              [0:C , 0:C4] = waT  (conv  weight, transposed (in, out))
#              [0:C , C4  ] = b3   (conv3 bias)
#              [C   , 0:C4] = ba   (conv  bias)
#              [C+1 , 0:C4] = wa1  (conv1 weight, out=1)
#              [C+1 , C4  ] = ba1  (conv1 bias)
#   out_ref: (KB, C, HW)
# ----------------------------------------------------------------------------
def _viewport_kernel(x_ref, w3_ref, gp_ref, out_ref):
    KB = x_ref.shape[0]
    twoC, C = w3_ref.shape
    C4 = gp_ref.shape[1] - 1

    # Resident weights / packed params (constant block index -> loaded once).
    W3 = w3_ref[...]                                     # (2C, C)
    waT = gp_ref[0:C, 0:C4]                              # (C, C4)
    b3 = gp_ref[0:C, C4:C4 + 1]                          # (C, 1)
    ba = gp_ref[C:C + 1, 0:C4]                           # (1, C4)
    wa1 = gp_ref[C + 1:C + 2, 0:C4]                      # (1, C4)
    ba1 = gp_ref[C + 1:C + 2, C4:C4 + 1]                 # (1, 1)

    for b in range(KB):                                  # static unroll, KB small
        X = x_ref[b]                                     # (C, HW)

        # conv3 on the stacked weight: depends only on X and W3, so the MXU
        # starts immediately; the serial gate chain below hides underneath it.
        P = jnp.dot(W3, X, preferred_element_type=jnp.float32)      # (2C, HW) MXU

        # gate path: GAP -> 1x1 (C->C/4) -> GELU -> 1x1 (C/4->1) -> sigmoid.
        # All VPU/XLU/EUP broadcast + reduce (no degenerate MXU contractions).
        gap = jnp.mean(X, axis=-1, keepdims=True)                   # (C, 1)
        t = jnp.sum(gap * waT, axis=0, keepdims=True) + ba          # (1, C4)
        t = _gelu(t)
        s = jax.nn.sigmoid(
            jnp.sum(t * wa1, axis=-1, keepdims=True) + ba1)         # (1, 1)

        # out = W3a @ x + s * (W3b @ x) + b3   (VPU combine, lane-dense store)
        out_ref[b] = P[0:C, :] + s * P[C:twoC, :] + b3


# ----------------------------------------------------------------------------
# Wrapper: NCHW in -> free (B, C, H*W) view -> one pallas_call -> NCHW out
# ----------------------------------------------------------------------------
def _pick_batch_block(B):
    """Largest KB dividing B that still leaves >= 2 grid steps (keeps v7x's
    second TensorCore busy); falls back to KB=1."""
    for kb in (8, 4, 2):
        if B % kb == 0 and B // kb >= 2:
            return kb
    return 1


@jax.jit
def viewport_distortion(x_nchw, packed):
    B, C, H, W = x_nchw.shape
    HW = H * W
    w3, gp = packed['w3'], packed['gp']
    KB = _pick_batch_block(B)

    x = x_nchw.reshape(B, C, HW).astype(jnp.float32)     # free HBM view

    out = pl.pallas_call(
        _viewport_kernel,
        out_shape=jax.ShapeDtypeStruct((B, C, HW), jnp.float32),
        grid=(B // KB,),
        in_specs=[
            pl.BlockSpec((KB, C, HW), lambda i: (i, 0, 0)),
            pl.BlockSpec(w3.shape, lambda i: (0, 0)),
            pl.BlockSpec(gp.shape, lambda i: (0, 0)),
        ],
        out_specs=pl.BlockSpec((KB, C, HW), lambda i: (i, 0, 0)),
        compiler_params=pltpu.CompilerParams(dimension_semantics=("parallel",)),
        # TODO(synk): if this module is ever run at C>=512 / HW>=4096, add
        # vmem_limit_bytes headroom and tile HW in the BlockSpec for v7x's
        # smaller (64 MiB physical / 32 MiB scoped) VMEM.
    )(x, w3, gp)

    return out.reshape(B, C, H, W)                       # free HBM view


# ----------------------------------------------------------------------------
# One-time parameter packing (stacked conv3 weight + small-param slab).
# ----------------------------------------------------------------------------
def pack_params(p):
    C, C4 = p['waT'].shape
    w3 = jnp.concatenate([p['w3a'], p['w3b']], axis=0)            # (2C, C)
    gp = jnp.zeros((C + 2, C4 + 1), jnp.float32)
    gp = gp.at[0:C, 0:C4].set(p['waT'])
    gp = gp.at[0:C, C4].set(p['b3'][:, 0])
    gp = gp.at[C, 0:C4].set(p['ba'][0])
    gp = gp.at[C + 1, 0:C4].set(p['wa1'][0])
    gp = gp.at[C + 1, C4].set(p['ba1'][0, 0])
    return {'w3': w3, 'gp': gp}


# ----------------------------------------------------------------------------
# Deterministic parameter init (PyTorch Conv2d-style uniform).
# conv_c / conv_c1 exist in the PyTorch module but are unused by forward().
# ----------------------------------------------------------------------------
def init_params(key, C):
    C4 = C // 4
    keys = iter(jax.random.split(key, 8))

    def u(shape, fan_in):
        b = 1.0 / math.sqrt(fan_in)
        return jax.random.uniform(next(keys), shape, jnp.float32, -b, b)

    p = {}
    p['waT'], p['ba'] = u((C, C4), C), u((1, C4), C)      # conv:  C   -> C/4 (transposed)
    p['wa1'], p['ba1'] = u((1, C4), C4), u((1, 1), C4)    # conv1: C/4 -> 1
    p['w3a'] = u((C, C), 2 * C)                           # conv3, acts on x
    p['w3b'] = u((C, C), 2 * C)                           # conv3, acts on x1
    p['b3'] = u((C, 1), 2 * C)
    return p


# ----------------------------------------------------------------------------
# Pure-JAX reference (verification only) — mirrors the PyTorch forward exactly.
# ----------------------------------------------------------------------------
def reference(x_nchw, p):
    x = x_nchw.astype(jnp.float32)
    gap = jnp.mean(x, axis=(2, 3), keepdims=True)                          # (B,C,1,1)
    t = jnp.einsum('bihw,io->bohw', gap, p['waT']) + p['ba'][0][None, :, None, None]
    t = jax.nn.gelu(t, approximate=False)
    g = jnp.einsum('bihw,oi->bohw', t, p['wa1']) + p['ba1'][0][None, :, None, None]
    s = jax.nn.sigmoid(g)                                                  # (B,1,1,1)
    x1 = s * x
    cat = jnp.concatenate([x, x1], axis=1)                                 # (B,2C,H,W)
    w3 = jnp.concatenate([p['w3a'], p['w3b']], axis=1)                     # (C,2C)
    out = jnp.einsum('bihw,oi->bohw', cat, w3) + p['b3'][:, 0][None, :, None, None]
    return out


if __name__ == "__main__":
    key = jax.random.PRNGKey(0)
    kx, kp = jax.random.split(key)
    B, C, H, W = 2, 32, 16, 16                    # embed_dim = 32 (divisible by 4)
    x = jax.random.normal(kx, (B, C, H, W), jnp.float32)
    params = init_params(kp, C)
    packed = pack_params(params)

    out = jax.block_until_ready(viewport_distortion(x, packed))
    assert out.shape == (B, C, H, W)

    ref = jax.block_until_ready(reference(x, params))
    np.testing.assert_allclose(np.asarray(out), np.asarray(ref), rtol=1e-3, atol=1e-3)

    print("KERNEL_OK")
</pallas_src>

<mosaic_0001>
module attributes {stable_mosaic.version = 11 : i64} {
  func.func @_viewport_kernel(%arg0: i32, %arg1: memref<1x32x256xf32, #tpu.memory_space<vmem>>, %arg2: memref<64x32xf32, #tpu.memory_space<vmem>>, %arg3: memref<34x9xf32, #tpu.memory_space<vmem>>, %arg4: memref<1x32x256xf32, #tpu.memory_space<vmem>>) attributes {dimension_semantics = [#tpu.dimension_semantics<parallel>], iteration_bounds = array<i64: 2>, scalar_prefetch = 0 : i64, scratch_operands = 0 : i64, tpu.core_type = #tpu.core_type<tc>, window_params = [{transform_indices = @transform_0, window_bounds = array<i64: 1, 32, 256>}, {pipeline_mode = #tpu.pipeline_mode<synchronous>, transform_indices = @transform_1, window_bounds = array<i64: 64, 32>}, {pipeline_mode = #tpu.pipeline_mode<synchronous>, transform_indices = @transform_2, window_bounds = array<i64: 34, 9>}, {transform_indices = @transform_3, window_bounds = array<i64: 1, 32, 256>}]} {
    %c0 = arith.constant 0 : index
    %c0_0 = arith.constant 0 : index
    %0 = vector.load %arg2[%c0, %c0_0] : memref<64x32xf32, #tpu.memory_space<vmem>>, vector<64x32xf32>
    %c0_1 = arith.constant 0 : index
    %c0_2 = arith.constant 0 : index
    %1 = vector.load %arg3[%c0_1, %c0_2] : memref<34x9xf32, #tpu.memory_space<vmem>>, vector<32x8xf32>
    %c0_3 = arith.constant 0 : index
    %c8 = arith.constant 8 : index
    %2 = vector.load %arg3[%c0_3, %c8] : memref<34x9xf32, #tpu.memory_space<vmem>>, vector<32x1xf32>
    %c32 = arith.constant 32 : index
    %c0_4 = arith.constant 0 : index
    %3 = vector.load %arg3[%c32, %c0_4] : memref<34x9xf32, #tpu.memory_space<vmem>>, vector<1x8xf32>
    %c33 = arith.constant 33 : index
    %c0_5 = arith.constant 0 : index
    %4 = vector.load %arg3[%c33, %c0_5] : memref<34x9xf32, #tpu.memory_space<vmem>>, vector<1x8xf32>
    %c33_6 = arith.constant 33 : index
    %c8_7 = arith.constant 8 : index
    %5 = vector.load %arg3[%c33_6, %c8_7] : memref<34x9xf32, #tpu.memory_space<vmem>>, vector<1x1xf32>
    %c0_8 = arith.constant 0 : index
    %c0_9 = arith.constant 0 : index
    %c0_10 = arith.constant 0 : index
    %6 = vector.load %arg1[%c0_8, %c0_9, %c0_10] : memref<1x32x256xf32, #tpu.memory_space<vmem>>, vector<1x32x256xf32>
    %7 = vector.shape_cast %6 : vector<1x32x256xf32> to vector<32x256xf32>
    %cst = arith.constant dense<0.000000e+00> : vector<64x256xf32>
    %8 = tpu.matmul %0, %7, %cst {dimension_numbers = #tpu.dot_dimension_numbers<[1], [0], [0], [1], [0, 0, 1, 1], [], []>} : vector<64x32xf32>, vector<32x256xf32>, vector<64x256xf32> -> vector<64x256xf32>
    %cst_11 = arith.constant dense<0.000000e+00> : vector<32xf32>
    %9 = vector.multi_reduction <add>, %7, %cst_11 [1] : vector<32x256xf32> to vector<32xf32>
    %10 = vector.shape_cast %9 : vector<32xf32> to vector<32x1xf32>
    %cst_12 = arith.constant 2.560000e+02 : f32
    %11 = vector.broadcast %cst_12 : f32 to vector<32x1xf32>
    %12 = arith.divf %10, %11 : vector<32x1xf32>
    %13 = vector.broadcast %12 : vector<32x1xf32> to vector<32x8xf32>
    %14 = arith.mulf %13, %1 : vector<32x8xf32>
    %cst_13 = arith.constant dense<0.000000e+00> : vector<8xf32>
    %15 = vector.multi_reduction <add>, %14, %cst_13 [0] : vector<32x8xf32> to vector<8xf32>
    %16 = vector.shape_cast %15 : vector<8xf32> to vector<1x8xf32>
    %17 = arith.addf %16, %3 : vector<1x8xf32>
    %cst_14 = arith.constant 5.000000e-01 : f32
    %18 = vector.broadcast %cst_14 : f32 to vector<1x8xf32>
    %19 = arith.mulf %18, %17 : vector<1x8xf32>
    %cst_15 = arith.constant 0.707106769 : f32
    %20 = vector.broadcast %cst_15 : f32 to vector<1x8xf32>
    %21 = arith.mulf %17, %20 : vector<1x8xf32>
    %cst_16 = arith.constant 0.000000e+00 : f32
    %22 = vector.broadcast %cst_16 : f32 to vector<1x8xf32>
    %23 = arith.cmpf oge, %21, %22 : vector<1x8xf32>
    %cst_17 = arith.constant 1.000000e+00 : f32
    %cst_18 = arith.constant -1.000000e+00 : f32
    %24 = vector.broadcast %cst_17 : f32 to vector<1x8xf32>
    %25 = vector.broadcast %cst_18 : f32 to vector<1x8xf32>
    %26 = arith.select %23, %24, %25 : vector<1x8xi1>, vector<1x8xf32>
    %27 = math.absf %21 : vector<1x8xf32>
    %cst_19 = arith.constant 0.327591091 : f32
    %28 = vector.broadcast %cst_19 : f32 to vector<1x8xf32>
    %29 = arith.mulf %28, %27 : vector<1x8xf32>
    %cst_20 = arith.constant 1.000000e+00 : f32
    %30 = vector.broadcast %cst_20 : f32 to vector<1x8xf32>
    %31 = arith.addf %30, %29 : vector<1x8xf32>
    %cst_21 = arith.constant 1.000000e+00 : f32
    %32 = vector.broadcast %cst_21 : f32 to vector<1x8xf32>
    %33 = arith.divf %32, %31 : vector<1x8xf32>
    %cst_22 = arith.constant 1.06140542 : f32
    %34 = vector.broadcast %cst_22 : f32 to vector<1x8xf32>
    %35 = arith.mulf %34, %33 : vector<1x8xf32>
    %cst_23 = arith.constant -1.45315206 : f32
    %36 = vector.broadcast %cst_23 : f32 to vector<1x8xf32>
    %37 = arith.addf %35, %36 : vector<1x8xf32>
    %38 = arith.mulf %37, %33 : vector<1x8xf32>
    %cst_24 = arith.constant 1.42141378 : f32
    %39 = vector.broadcast %cst_24 : f32 to vector<1x8xf32>
    %40 = arith.addf %38, %39 : vector<1x8xf32>
    %41 = arith.mulf %40, %33 : vector<1x8xf32>
    %cst_25 = arith.constant -0.284496725 : f32
    %42 = vector.broadcast %cst_25 : f32 to vector<1x8xf32>
    %43 = arith.addf %41, %42 : vector<1x8xf32>
    %44 = arith.mulf %43, %33 : vector<1x8xf32>
    %cst_26 = arith.constant 0.254829586 : f32
    %45 = vector.broadcast %cst_26 : f32 to vector<1x8xf32>
    %46 = arith.addf %44, %45 : vector<1x8xf32>
    %47 = arith.mulf %46, %33 : vector<1x8xf32>
    %cst_27 = arith.constant 0.000000e+00 : f32
    %48 = vector.broadcast %cst_27 : f32 to vector<1x8xf32>
    %49 = arith.subf %48, %27 : vector<1x8xf32>
    %50 = arith.mulf %49, %27 : vector<1x8xf32>
    %51 = math.exp %50 : vector<1x8xf32>
    %52 = arith.mulf %47, %51 : vector<1x8xf32>
    %cst_28 = arith.constant 1.000000e+00 : f32
    %53 = vector.broadcast %cst_28 : f32 to vector<1x8xf32>
    %54 = arith.subf %53, %52 : vector<1x8xf32>
    %55 = arith.mulf %26, %54 : vector<1x8xf32>
    %cst_29 = arith.constant 1.000000e+00 : f32
    %56 = vector.broadcast %cst_29 : f32 to vector<1x8xf32>
    %57 = arith.addf %56, %55 : vector<1x8xf32>
    %58 = arith.mulf %19, %57 : vector<1x8xf32>
    %59 = arith.mulf %58, %4 : vector<1x8xf32>
    %cst_30 = arith.constant dense<0.000000e+00> : vector<1xf32>
    %60 = vector.multi_reduction <add>, %59, %cst_30 [1] : vector<1x8xf32> to vector<1xf32>
    %61 = vector.shape_cast %60 : vector<1xf32> to vector<1x1xf32>
    %62 = arith.addf %61, %5 : vector<1x1xf32>
    %63 = arith.negf %62 : vector<1x1xf32>
    %64 = math.exp %63 : vector<1x1xf32>
    %cst_31 = arith.constant 1.000000e+00 : f32
    %65 = vector.broadcast %cst_31 : f32 to vector<1x1xf32>
    %66 = arith.addf %65, %64 : vector<1x1xf32>
    %67 = arith.divf %65, %66 : vector<1x1xf32>
    %68 = vector.extract_strided_slice %8 {offsets = [0, 0], sizes = [32, 256], strides = [1, 1]} : vector<64x256xf32> to vector<32x256xf32>
    %69 = vector.extract_strided_slice %8 {offsets = [32, 0], sizes = [32, 256], strides = [1, 1]} : vector<64x256xf32> to vector<32x256xf32>
    %70 = vector.broadcast %67 : vector<1x1xf32> to vector<32x256xf32>
    %71 = arith.mulf %70, %69 : vector<32x256xf32>
    %72 = arith.addf %68, %71 : vector<32x256xf32>
    %73 = vector.broadcast %2 : vector<32x1xf32> to vector<32x256xf32>
    %74 = arith.addf %72, %73 : vector<32x256xf32>
    %c0_32 = arith.constant 0 : index
    %c0_33 = arith.constant 0 : index
    %c0_34 = arith.constant 0 : index
    %75 = vector.load %arg4[%c0_32, %c0_33, %c0_34] : memref<1x32x256xf32, #tpu.memory_space<vmem>>, vector<1x32x256xf32>
    %76 = vector.shape_cast %75 : vector<1x32x256xf32> to vector<32x256xf32>
    %77 = vector.shape_cast %74 : vector<32x256xf32> to vector<1x32x256xf32>
    tpu.vector_store %arg4[%c0_32, %c0_33, %c0_34], %77 {strides = array<i32>} : memref<1x32x256xf32, #tpu.memory_space<vmem>>, vector<1x32x256xf32>,
    return
  }
  func.func @transform_0(%arg0: i32) -> (i32, i32, i32) {
    %c0_i32 = arith.constant 0 : i32
    %c0_i32_0 = arith.constant 0 : i32
    %c0_i32_1 = arith.constant 0 : i32
    return %arg0, %c0_i32, %c0_i32_0 : i32, i32, i32
  }
  func.func @transform_1(%arg0: i32) -> (i32, i32) {
    %c0_i32 = arith.constant 0 : i32
    %c0_i32_0 = arith.constant 0 : i32
    %c0_i32_1 = arith.constant 0 : i32
    return %c0_i32, %c0_i32_0 : i32, i32
  }
  func.func @transform_2(%arg0: i32) -> (i32, i32) {
    %c0_i32 = arith.constant 0 : i32
    %c0_i32_0 = arith.constant 0 : i32
    %c0_i32_1 = arith.constant 0 : i32
    return %c0_i32, %c0_i32_0 : i32, i32
  }
  func.func @transform_3(%arg0: i32) -> (i32, i32, i32) {
    %c0_i32 = arith.constant 0 : i32
    %c0_i32_0 = arith.constant 0 : i32
    %c0_i32_1 = arith.constant 0 : i32
    return %arg0, %c0_i32, %c0_i32_0 : i32, i32, i32
  }
}

</mosaic_0001>

<llo_original>
// kernel: viewport_distortion.1
$region0: #{viewport_distortion.1}
  #allocation0 [shape = 'u32[]', space=smem, size = 0x4, offset = 0x4, fixed_abs, tag = 'smem constant byte address 0x4 - core index']
  #allocation1 [shape = 'u32[144,128]{1,0:T(1,128)}', space=vmem, size = 0x12000, scoped, tag = 'internal scratch']
  %s0 = inlined_call_operand.vmem [shape: f32[2,32,256], index: 0, kind: input, shape index: {}]
  %s1 = inlined_call_operand.vmem [shape: f32[64,32], index: 1, kind: input, shape index: {}]
  %s2 = inlined_call_operand.vmem [shape: f32[34,9], index: 2, kind: input, shape index: {}]
  %s3 = inlined_call_operand.vmem [shape: f32[2,32,256], index: 3, kind: output, shape index: {}]
  %s4 = sld [smem:[#allocation0]]
  $region45: #{viewport_distortion.1} parent=0
    _
  %s6 = ssub.s32 1, %s4
  %s7 = scalar_select 0, %s6, %s4
  loop: start=0, step=1, limit=4
  $region2: #{viewport_distortion.1} parent=0 // loop_pre_header
    _
  $region3: #{viewport_distortion.1} parent=0 // loop_header
    %s9 = sphi 0, %s13
    %p10 = scmp.ge.s32.totalorder %s9, 4
    %s19 = sphi 0, %s21
    %s22 = sphi 0, %s19
    %s23 = sphi 0, %s22
    %s39 = sphi 0, %s23
    %s43 = sphi 0, %s43
    %s45 = sphi 0, %s43
    %s46 = sphi 0, %s45
    %s60 = sphi 0, %s46
    %s64 = sphi 0, %s64
    %s66 = sphi 0, %s64
    %s67 = sphi 0, %s66
    %s81 = sphi 0, %s67
    %s87 = sphi 0, %s89
    %s90 = sphi 0, %s87
    %s91 = sphi 0, %s90
    %s107 = sphi 0, %s91
  $region4: #{viewport_distortion.1} parent=0 // loop_header_branch
    %12 = sbr.rel (%p10) target = $region8
  $region5: #{viewport_distortion.1} parent=0 // loop_body
    %s14 = ssub.s32 %s9, 1
    %s15 = ssub.s32 %s9, 2
    %s16 = sadd.s32 %s9, 1
    %s17 = ssub.s32 %s9, %s16
    %p18 = scmp.eq.s32.totalorder %s17, 0
    %s20 = sadd.s32 %s19, 1
    %s21 = scalar_select %p18, %s19, %s20
    %p24 = pneg %p18
    %p25 = scmp.eq.s32.totalorder %s9, 1
    %p26 = por %p24, %p25
    %p27 = scmp.ne.s32.totalorder %s19, %s22
    %p28 = scmp.eq.s32.totalorder %s9, 0
    %p29 = por %p27, %p28
    %p30 = scmp.ne.s32.totalorder %s19, %s22
    %p31 = scmp.eq.s32.totalorder %s14, 1
    %p32 = por %p30, %p31
    %p33 = scmp.ne.s32.totalorder %s22, %s23
    %p34 = scmp.eq.s32.totalorder %s14, 0
    %p35 = por %p33, %p34
    %p36 = scmp.ne.s32.totalorder %s22, %s23
    %p37 = scmp.eq.s32.totalorder %s15, 1
    %p38 = por %p36, %p37
    %p40 = scmp.ne.s32.totalorder %s23, %s39
    %p41 = scmp.eq.s32.totalorder %s15, 0
    %p42 = por %p40, %p41
    %s44 = sadd.s32 %s43, 1
    %p47 = scmp.eq.s32.totalorder %s9, 1
    %p48 = scmp.ne.s32.totalorder %s43, %s45
    %p49 = scmp.eq.s32.totalorder %s9, 0
    %p50 = por %p48, %p49
    %p51 = scmp.ne.s32.totalorder %s43, %s45
    %p52 = scmp.eq.s32.totalorder %s14, 1
    %p53 = por %p51, %p52
    %p54 = scmp.ne.s32.totalorder %s45, %s46
    %p55 = scmp.eq.s32.totalorder %s14, 0
    %p56 = por %p54, %p55
    %p57 = scmp.ne.s32.totalorder %s45, %s46
    %p58 = scmp.eq.s32.totalorder %s15, 1
    %p59 = por %p57, %p58
    %p61 = scmp.ne.s32.totalorder %s46, %s60
    %p62 = scmp.eq.s32.totalorder %s15, 0
    %p63 = por %p61, %p62
    %s65 = sadd.s32 %s64, 1
    %p68 = scmp.eq.s32.totalorder %s9, 1
    %p69 = scmp.ne.s32.totalorder %s64, %s66
    %p70 = scmp.eq.s32.totalorder %s9, 0
    %p71 = por %p69, %p70
    %p72 = scmp.ne.s32.totalorder %s64, %s66
    %p73 = scmp.eq.s32.totalorder %s14, 1
    %p74 = por %p72, %p73
    %p75 = scmp.ne.s32.totalorder %s66, %s67
    %p76 = scmp.eq.s32.totalorder %s14, 0
    %p77 = por %p75, %p76
    %p78 = scmp.ne.s32.totalorder %s66, %s67
    %p79 = scmp.eq.s32.totalorder %s15, 1
    %p80 = por %p78, %p79
    %p82 = scmp.ne.s32.totalorder %s67, %s81
    %p83 = scmp.eq.s32.totalorder %s15, 0
    %p84 = por %p82, %p83
    %s85 = ssub.s32 %s9, %s16
    %p86 = scmp.eq.s32.totalorder %s85, 0
    %s88 = sadd.s32 %s87, 1
    %s89 = scalar_select %p86, %s87, %s88
    %p92 = pneg %p86
    %p93 = scmp.eq.s32.totalorder %s9, 1
    %p94 = por %p92, %p93
    %p95 = scmp.ne.s32.totalorder %s87, %s90
    %p96 = scmp.eq.s32.totalorder %s9, 0
    %p97 = por %p95, %p96
    %p98 = scmp.ne.s32.totalorder %s87, %s90
    %p99 = scmp.eq.s32.totalorder %s14, 1
    %p100 = por %p98, %p99
    %p101 = scmp.ne.s32.totalorder %s90, %s91
    %p102 = scmp.eq.s32.totalorder %s14, 0
    %p103 = por %p101, %p102
    %p104 = scmp.ne.s32.totalorder %s90, %s91
    %p105 = scmp.eq.s32.totalorder %s15, 1
    %p106 = por %p104, %p105
    %p108 = scmp.ne.s32.totalorder %s91, %s107
    %p109 = scmp.eq.s32.totalorder %s15, 0
    %p110 = por %p108, %p109
    %p111 = scmp.le.s32.totalorder 1, %s9
    %p112 = scmp.lt.s32.totalorder %s9, 3
    %p113 = pnand %p111, %p112
    %p114 = pneg %p113
    // Predicated region
    $region9: #{viewport_distortion.1} parent=5 // pred_check
      _
    $region10: #{viewport_distortion.1} parent=5 // pred_check_branch
      %116 = sbr.rel (%p113) target = $region12
    $region11: #{viewport_distortion.1} parent=5 // pred_region
      %s117 = ssub.s32 %s9, 1
      // Predicated region
      $region13: #{viewport_distortion.1} parent=11 // pred_check
        %p118 = pneg %p56
      $region14: #{viewport_distortion.1} parent=11 // pred_check_branch
        %120 = sbr.rel (%p118) target = $region16
      $region15: #{viewport_distortion.1} parent=11 // pred_region
        _
      $region16: #{viewport_distortion.1} parent=11 // pred_fallthru
        _
      // Predicated region
      $region17: #{viewport_distortion.1} parent=11 // pred_check
        %p121 = pneg %p77
      $region18: #{viewport_distortion.1} parent=11 // pred_check_branch
        %123 = sbr.rel (%p121) target = $region20
      $region19: #{viewport_distortion.1} parent=11 // pred_region
        _
      $region20: #{viewport_distortion.1} parent=11 // pred_fallthru
        _
    $region12: #{viewport_distortion.1} parent=5 // pred_fallthru
      _
    %p124 = scmp.lt.s32.totalorder %s9, 2
    // Predicated region
    $region21: #{viewport_distortion.1} parent=5 // pred_check
      %p125 = pneg %p124
    $region22: #{viewport_distortion.1} parent=5 // pred_check_branch
      %127 = sbr.rel (%p125) target = $region24
    $region23: #{viewport_distortion.1} parent=5 // pred_region
      // Predicated region
      $region25: #{viewport_distortion.1} parent=23 // pred_check
        %p128 = pneg %p29
      $region26: #{viewport_distortion.1} parent=23 // pred_check_branch
        %130 = sbr.rel (%p128) target = $region28
      $region27: #{viewport_distortion.1} parent=23 // pred_region
        %p131 = scmp.lt.s32.totalorder %s9, 1
        %s132 = scalar_select %p131, %s9, 1
        %s133 = smul.addr %s132, 8
        %s134 = smul.addr %s133, 8
        %s135 = scalar_lea.vmem %s0, %s134
      $region28: #{viewport_distortion.1} parent=23 // pred_fallthru
        _
    $region24: #{viewport_distortion.1} parent=5 // pred_fallthru
      _
    %p136 = scmp.le.s32.totalorder 1, %s9
    %p137 = scmp.lt.s32.totalorder %s9, 3
    %p138 = pnand %p136, %p137
    %p139 = pneg %p138
    // Predicated region
    $region29: #{viewport_distortion.1} parent=5 // pred_check
      _
    $region30: #{viewport_distortion.1} parent=5 // pred_check_branch
      %141 = sbr.rel (%p138) target = $region32
    $region31: #{viewport_distortion.1} parent=5 // pred_region
      %s142 = ssub.s32 %s9, 1
      %p143 = scmp.lt.s32.totalorder %s14, 1
      %s144 = scalar_select %p143, %s14, 1
      %s145 = smul.addr %s144, 8
      %s146 = smul.addr %s145, 8
      %s147 = scalar_lea.vmem %s0, %s146
      %p148 = pneg %p35
      %p149 = pneg %p32
      %p150 = pneg %p56
      %p151 = pneg %p53
      %p152 = pneg %p77
      %p153 = pneg %p74
      %p154 = pneg %p103
      %p155 = pneg %p100
      %p156 = scmp.lt.s32.totalorder %s14, 1
      %s157 = scalar_select %p156, %s14, 1
      %s158 = smul.addr %s157, 8
      %s159 = smul.addr %s158, 8
      %s160 = scalar_lea.vmem %s3, %s159
      %p161 = scmp.lt.s32.totalorder %s14, 1
      %s162 = scalar_select %p161, %s14, 1
      %s163 = smul.addr %s162, 8
      %s164 = smul.addr %s163, 8
      %s165 = scalar_lea.vmem %s0, %s164
      %p166 = scmp.lt.s32.totalorder %s14, 1
      %s167 = scalar_select %p166, %s14, 1
      %s168 = smul.addr %s167, 8
      %s169 = smul.addr %s168, 8
      %s170 = scalar_lea.vmem %s3, %s169
      %v171 = vld [vmem:[%s1] sm:$0xff]
      %v172 = vld [vmem:[%s1 + $0x8] sm:$0xff]
      %v173 = vld [vmem:[%s1 + $0x10] sm:$0xff]
      %v174 = vld [vmem:[%s1 + $0x18] sm:$0xff]
      %v175 = vld [vmem:[%s1 + $0x20] sm:$0xff]
      %v176 = vld [vmem:[%s1 + $0x28] sm:$0xff]
      %v177 = vld [vmem:[%s1 + $0x30] sm:$0xff]
      %v178 = vld [vmem:[%s1 + $0x38] sm:$0xff]
      %v179 = vld [vmem:[%s2] sm:$0xff]
      %v180 = vld [vmem:[%s2 + $0x8] sm:$0xff]
      %v181 = vld [vmem:[%s2 + $0x10] sm:$0xff]
      %v182 = vld [vmem:[%s2 + $0x18] sm:$0xff]
      %v183 = vld [vmem:[%s2 + $0x20] sm:$0x1]
      %v184 = vld [vmem:[%s2 + $0x21] sm:$0x1]
      %v185 = vld [vmem:[%s165] sm:$0xff]
      %v186 = vld [vmem:[%s165 + $0x8] sm:$0xff]
      %v187 = vld [vmem:[%s165 + $0x10] sm:$0xff]
      %v188 = vld [vmem:[%s165 + $0x18] sm:$0xff]
      %v189 = vld [vmem:[%s165 + $0x20] sm:$0xff]
      %v190 = vld [vmem:[%s165 + $0x28] sm:$0xff]
      %v191 = vld [vmem:[%s165 + $0x30] sm:$0xff]
      %v192 = vld [vmem:[%s165 + $0x38] sm:$0xff]
      %vm193 = vcmask 261120
      %v195 = vsel %vm193, %v171, 0
      %v198 = vsel %vm193, %v172, 0
      %v201 = vsel %vm193, %v173, 0
      %v204 = vsel %vm193, %v174, 0
      %v207 = vsel %vm193, %v175, 0
      %v210 = vsel %vm193, %v176, 0
      %v213 = vsel %vm193, %v177, 0
      %v216 = vsel %vm193, %v178, 0
      %218 = vmatprep.subr.mxu0 %v186
      %219 = vmatpush1.msra.mxu0 %v185
      %220 = vmatprep.subr.mxu0 %v188
      %221 = vmatpush1.msra.mxu0 %v187
      %222 = vmatprep.subr.mxu0 %v190
      %223 = vmatpush1.msra.mxu0 %v189
      %224 = vmatprep.subr.mxu0 %v192
      %225 = vmatpush1.msra.mxu0 %v191
      %226 = vmatprep.subr.mxu0 0.0
      %227 = vmatpush1.msra.mxu0 0.0
      %228 = vmatprep.subr.mxu0 0.0
      %229 = vmatpush1.msra.mxu0 0.0
      %230 = vmatprep.subr.mxu0 0.0
      %231 = vmatpush1.msra.mxu0 0.0
      %232 = vmatprep.subr.mxu0 0.0
      %233 = vmatpush1.msra.mxu0 0.0
      %234 = vmatprep.subr.mxu0 0.0
      %235 = vmatpush1.msra.mxu0 0.0
      %236 = vmatprep.subr.mxu0 0.0
      %237 = vmatpush1.msra.mxu0 0.0
      %238 = vmatprep.subr.mxu0 0.0
      %239 = vmatpush1.msra.mxu0 0.0
      %240 = vmatprep.subr.mxu0 0.0
      %241 = vmatpush1.msra.mxu0 0.0
      %242 = vmatprep.subr.mxu0 0.0
      %243 = vmatpush1.msra.mxu0 0.0
      %244 = vmatprep.subr.mxu0 0.0
      %245 = vmatpush1.msra.mxu0 0.0
      %246 = vmatprep.subr.mxu0 0.0
      %247 = vmatpush1.msra.mxu0 0.0
      %248 = vmatprep.subr.mxu0 0.0
      %249 = vmatpush1.msra.mxu0 0.0
      %250 = vmatprep.subr.mxu0 0.0
      %251 = vmatpush1.msra.mxu0 0.0
      %252 = vmatprep.subr.mxu0 0.0
      %253 = vmatpush1.msra.mxu0 0.0
      %254 = vmatprep.subr.mxu0 0.0
      %255 = vmatpush1.msra.mxu0 0.0
      %256 = vmatprep.subr.mxu0 0.0
      %257 = vmatpush1.msra.mxu0 0.0
      %258 = vmatprep.subr.mxu0 0.0
      %259 = vmatpush1.msra.mxu0 0.0
      %260 = vmatprep.subr.mxu0 0.0
      %261 = vmatpush1.msra.mxu0 0.0
      %262 = vmatprep.subr.mxu0 0.0
      %263 = vmatpush1.msra.mxu0 0.0
      %264 = vmatprep.subr.mxu0 0.0
      %265 = vmatpush1.msra.mxu0 0.0
      %266 = vmatprep.subr.mxu0 0.0
      %267 = vmatpush1.msra.mxu0 0.0
      %268 = vmatprep.subr.mxu0 0.0
      %269 = vmatpush1.msra.mxu0 0.0
      %270 = vmatprep.subr.mxu0 0.0
      %271 = vmatpush1.msra.mxu0 0.0
      %272 = vmatprep.subr.mxu0 0.0
      %273 = vmatpush1.msra.mxu0 0.0
      %274 = vmatprep.subr.mxu0 0.0
      %275 = vmatpush1.msra.mxu0 0.0
      %276 = vmatprep.subr.mxu0 0.0
      %277 = vmatpush1.msra.mxu0 0.0
      %278 = vmatprep.subr.mxu0 0.0
      %279 = vmatpush1.msra.mxu0 0.0
      %280 = vmatprep.subr.mxu0 0.0
      %281 = vmatpush1.msra.mxu0 0.0
      %282 = vmatprep.mubr.f32.mxu0 0.0
      %283 = vmatmul.mubr.f32.gmra.mrb[0].mxu0 %v195
      %v284 = vpop.f32.mrb[0].mxu0
      %v285 = vadd.f32 0.0, %v284
      %v286 = vpop.f32.mrb[0].mxu0
      %v287 = vadd.f32 0.0, %v286
      %288 = vmatprep.mubr.f32.mxu0 0.0
      %289 = vmatmul.mubr.f32.gmra.mrb[0].mxu0 %v198
      %v290 = vpop.f32.mrb[0].mxu0
      %v291 = vadd.f32 0.0, %v290
      %v292 = vpop.f32.mrb[0].mxu0
      %v293 = vadd.f32 0.0, %v292
      %294 = vmatprep.mubr.f32.mxu0 0.0
      %295 = vmatmul.mubr.f32.gmra.mrb[0].mxu0 %v201
      %v296 = vpop.f32.mrb[0].mxu0
      %v297 = vadd.f32 0.0, %v296
      %v298 = vpop.f32.mrb[0].mxu0
      %v299 = vadd.f32 0.0, %v298
      %300 = vmatprep.mubr.f32.mxu0 0.0
      %301 = vmatmul.mubr.f32.gmra.mrb[0].mxu0 %v204
      %v302 = vpop.f32.mrb[0].mxu0
      %v303 = vadd.f32 0.0, %v302
      %v304 = vpop.f32.mrb[0].mxu0
      %v305 = vadd.f32 0.0, %v304
      %306 = vmatprep.mubr.f32.mxu0 0.0
      %307 = vmatmul.mubr.f32.gmra.mrb[0].mxu0 %v207
      %v308 = vpop.f32.mrb[0].mxu0
      %v309 = vadd.f32 0.0, %v308
      %v310 = vpop.f32.mrb[0].mxu0
      %v311 = vadd.f32 0.0, %v310
      %312 = vmatprep.mubr.f32.mxu0 0.0
      %313 = vmatmul.mubr.f32.gmra.mrb[0].mxu0 %v210
      %v314 = vpop.f32.mrb[0].mxu0
      %v315 = vadd.f32 0.0, %v314
      %v316 = vpop.f32.mrb[0].mxu0
      %v317 = vadd.f32 0.0, %v316
      %318 = vmatprep.mubr.f32.mxu0 0.0
      %319 = vmatmul.mubr.f32.gmra.mrb[0].mxu0 %v213
      %v320 = vpop.f32.mrb[0].mxu0
      %v321 = vadd.f32 0.0, %v320
      %v322 = vpop.f32.mrb[0].mxu0
      %v323 = vadd.f32 0.0, %v322
      %324 = vmatprep.mubr.f32.mxu0 0.0
      %325 = vmatmul.mubr.f32.gmra.mrb[0].mxu0 %v216
      %v326 = vpop.f32.mrb[0].mxu0
      %v327 = vadd.f32 0.0, %v326
      %v328 = vpop.f32.mrb[0].mxu0
      %v329 = vadd.f32 0.0, %v328
      %330 = vdwg.mxu0
      %v331 = vadd.f32 %v185, %v186
      %332 = vadd.xlane.f32.xlu0 %v331
      %v333 = vpop.xlane.xlu0 %332
      %v334 = vadd.f32 %v187, %v188
      %335 = vadd.xlane.f32.xlu0 %v334
      %v336 = vpop.xlane.xlu0 %335
      %v337 = vadd.f32 %v189, %v190
      %338 = vadd.xlane.f32.xlu0 %v337
      %v339 = vpop.xlane.xlu0 %338
      %v340 = vadd.f32 %v191, %v192
      %341 = vadd.xlane.f32.xlu0 %v340
      %v342 = vpop.xlane.xlu0 %341
      %v343 = vrcp.pop 256.0
      %v344 = vmul.f32 %v333, %v343
      %v345 = vmul.f32 %v336, %v343
      %v346 = vmul.f32 %v339, %v343
      %v347 = vmul.f32 %v342, %v343
      %v348 = vmul.f32 %v344, %v179
      %v349 = vmul.f32 %v345, %v180
      %v350 = vmul.f32 %v346, %v181
      %v351 = vmul.f32 %v347, %v182
      %vm352 = vcmask 64512
      %v353 = vsel %vm352, %v348, 0.0
      %v354 = vsel %vm352, %v349, 0.0
      %v355 = vadd.f32 %v353, %v354
      %v356 = vsel %vm352, %v350, 0.0
      %v357 = vadd.f32 %v355, %v356
      %v358 = vsel %vm352, %v351, 0.0
      %v359 = vadd.f32 %v357, %v358
      %v360 = vrot.slane %v359, 4
      %v361 = vadd.f32 %v359, %v360
      %v362 = vrot.slane %v361, 2
      %v363 = vadd.f32 %v361, %v362
      %v364 = vrot.slane %v363, 1
      %v365 = vadd.f32 %v363, %v364
      %v366 = vadd.f32 %v365, %v183
      %v367 = vmul.f32 %v366, 0.5
      %v368 = vmul.f32 %v366, 0.70710677
      %vm369 = vcmp.ge.f32.partialorder %v368, 0.0
      %v370 = vsel %vm369, 1.0, -1.0
      %v371 = vand.u32 2147483647, %v368
      %v372 = vmul.f32 %v371, 0.3275911
      %v373 = vadd.f32 %v372, 1.0
      %v374 = vrcp.pop %v373
      %v375 = vmul.f32 1.0, %v374
      %v376 = vmul.f32 %v375, 1.0614054
      %v377 = vadd.f32 %v376, -1.4531521
      %v378 = vmul.f32 %v377, %v375
      %v379 = vadd.f32 %v378, 1.4214138
      %v380 = vmul.f32 %v379, %v375
      %v381 = vadd.f32 %v380, -0.28449672
      %v382 = vmul.f32 %v381, %v375
      %v383 = vadd.f32 %v382, 0.2548296
      %v384 = vmul.f32 %v383, %v375
      %v385 = vsub.f32 0.0, %v371
      %v386 = vmul.f32 %v385, %v371
      %v387 = vmul.f32 %v386, 1.442695
      %v388 = vpow.pop %v387
      %v389 = vmul.f32 %v384, %v388
      %v390 = vsub.f32 1.0, %v389
      %v391 = vmul.f32 %v370, %v390
      %v392 = vadd.f32 %v391, 1.0
      %v393 = vmul.f32 %v367, %v392
      %v394 = vmul.f32 %v393, %v184
      %vm395 = vcmask 57344
      %v396 = vsel %vm395, %v394, 0.0
      %397 = vadd.xlane.f32.xlu0 %v396
      %v398 = vpop.xlane.xlu0 %397
      %v399 = vadd.f32 %v398, %v184
      %v400 = vxor.u32 %v399, 2147483648
      %v401 = vmul.f32 %v400, 1.442695
      %v402 = vpow.pop %v401
      %v403 = vadd.f32 %v402, 1.0
      %v404 = vrcp.pop %v403
      %v405 = vmul.f32 1.0, %v404
      %407 = vrot.lane.b32.xlu0 %v405, 120
      %v408 = vpop.permute.xlu0 %407
      %s409 = vtos %v408
      %v410 = vstv %s409
      %v412 = vmul.f32 %v410, %v309
      %v413 = vmul.f32 %v410, %v311
      %v414 = vmul.f32 %v410, %v315
      %v415 = vmul.f32 %v410, %v317
      %v416 = vmul.f32 %v410, %v321
      %v417 = vmul.f32 %v410, %v323
      %v418 = vmul.f32 %v410, %v327
      %v419 = vmul.f32 %v410, %v329
      %v420 = vadd.f32 %v285, %v412
      %v421 = vadd.f32 %v287, %v413
      %v422 = vadd.f32 %v291, %v414
      %v423 = vadd.f32 %v293, %v415
      %v424 = vadd.f32 %v297, %v416
      %v425 = vadd.f32 %v299, %v417
      %v426 = vadd.f32 %v303, %v418
      %v427 = vadd.f32 %v305, %v419
      %429 = vset.pattern.permute.xlu0 8
      %430 = vperm.xlu0 %429, %v179
      %v431 = vpop.permute.xlu0 %430
      %434 = vset.pattern.permute.xlu0 8
      %435 = vperm.xlu0 %434, %v180
      %v436 = vpop.permute.xlu0 %435
      %439 = vset.pattern.permute.xlu0 8
      %440 = vperm.xlu0 %439, %v181
      %v441 = vpop.permute.xlu0 %440
      %444 = vset.pattern.permute.xlu0 8
      %445 = vperm.xlu0 %444, %v182
      %v446 = vpop.permute.xlu0 %445
      %v448 = vadd.f32 %v420, %v431
      %v449 = vadd.f32 %v421, %v431
      %v450 = vadd.f32 %v422, %v436
      %v451 = vadd.f32 %v423, %v436
      %v452 = vadd.f32 %v424, %v441
      %v453 = vadd.f32 %v425, %v441
      %v454 = vadd.f32 %v426, %v446
      %v455 = vadd.f32 %v427, %v446
      %456 = vst [vmem:[%s170] sm:$0xff] %v448
      %457 = vst [vmem:[%s170 + $0x8] sm:$0xff] %v449
      %458 = vst [vmem:[%s170 + $0x10] sm:$0xff] %v450
      %459 = vst [vmem:[%s170 + $0x18] sm:$0xff] %v451
      %460 = vst [vmem:[%s170 + $0x20] sm:$0xff] %v452
      %461 = vst [vmem:[%s170 + $0x28] sm:$0xff] %v453
      %462 = vst [vmem:[%s170 + $0x30] sm:$0xff] %v454
      %463 = vst [vmem:[%s170 + $0x38] sm:$0xff] %v455
      %p464 = scmp.lt.s32.totalorder %s14, 1
      %s465 = scalar_select %p464, %s14, 1
      %s466 = smul.addr %s465, 8
      %s467 = smul.addr %s466, 8
      %s468 = scalar_lea.vmem %s3, %s467
      // Predicated region
      $region33: #{viewport_distortion.1} parent=31 // pred_check
        %p469 = pneg %p100
      $region34: #{viewport_distortion.1} parent=31 // pred_check_branch
        %471 = sbr.rel (%p469) target = $region36
      $region35: #{viewport_distortion.1} parent=31 // pred_region
        _
      $region36: #{viewport_distortion.1} parent=31 // pred_fallthru
        _
    $region32: #{viewport_distortion.1} parent=5 // pred_fallthru
      _
    %p472 = scmp.le.s32.totalorder 2, %s9
    // Predicated region
    $region37: #{viewport_distortion.1} parent=5 // pred_check
      %p473 = pneg %p472
    $region38: #{viewport_distortion.1} parent=5 // pred_check_branch
      %475 = sbr.rel (%p473) target = $region40
    $region39: #{viewport_distortion.1} parent=5 // pred_region
      %s476 = ssub.s32 %s9, 2
      // Predicated region
      $region41: #{viewport_distortion.1} parent=39 // pred_check
        %p477 = pneg %p106
      $region42: #{viewport_distortion.1} parent=39 // pred_check_branch
        %479 = sbr.rel (%p477) target = $region44
      $region43: #{viewport_distortion.1} parent=39 // pred_region
        %p480 = scmp.lt.s32.totalorder %s15, 1
        %s481 = scalar_select %p480, %s15, 1
        %s482 = smul.addr %s481, 8
        %s483 = smul.addr %s482, 8
        %s484 = scalar_lea.vmem %s3, %s483
      $region44: #{viewport_distortion.1} parent=39 // pred_fallthru
        _
    $region40: #{viewport_distortion.1} parent=5 // pred_fallthru
      _
  $region6: #{viewport_distortion.1} parent=0 // loop_footer
    %s13 = sadd.s32 1, %s9
  $region7: #{viewport_distortion.1} parent=0 // loop_footer_branch
    %8 = sbr.rel target = $region3
  $region8: #{viewport_distortion.1} parent=0 // loop_exit
    _

</llo_original>
